<compile_context>
chip_gen: v5e
topology: v5e:2x2
jax: 0.10.0
libtpu: 0.0.40
codegen_flags: <defaults>
</compile_context>

<pallas_src>
import functools
import math

import jax
import jax.numpy as jnp
from jax.experimental import pallas as pl
from jax.experimental.pallas import tpu as pltpu

LOG_SIG_MAX = 2.0
LOG_SIG_MIN = -20.0


def _round_up(x, m):
    return ((x + m - 1) // m) * m


def _cdiv(a, b):
    return (a + b - 1) // b


def _policy_kernel(state_ref, w1_ref, w2_ref, wh_ref, b_ref, out_ref, xpad_ref,
                   *, num_inputs, hidden_pad, out_pad):
    cdt = xpad_ref.dtype

    # Lane-pad + cast the raw (TB, num_inputs) state tile to (TB, K1) in VMEM.
    # Padded lanes are zero and hit zero-padded weight rows, so they contribute
    # nothing to the matmul.
    xpad_ref[...] = jnp.zeros_like(xpad_ref)
    xpad_ref[:, :num_inputs] = state_ref[...].astype(cdt)
    x = xpad_ref[...]

    b1 = b_ref[0:1, :hidden_pad]          # (1, H)  f32
    b2 = b_ref[1:2, :hidden_pad]
    bh = b_ref[2:3, :out_pad]             # (1, OUT) fused [bm | bs]
    lo = b_ref[3:4, :out_pad]             # -inf on mean lanes, LOG_SIG_MIN on log_std lanes
    hi = b_ref[4:5, :out_pad]             # +inf on mean lanes, LOG_SIG_MAX on log_std lanes

    # linear1 + ReLU (MXU accumulate f32, elementwise f32)
    h1 = jnp.maximum(jnp.dot(x, w1_ref[...], preferred_element_type=jnp.float32) + b1, 0.0)
    # linear2 + ReLU
    h2 = jnp.maximum(jnp.dot(h1.astype(cdt), w2_ref[...],
                             preferred_element_type=jnp.float32) + b2, 0.0)
    # fused mean / log_std head: one matmul, one lane-dense store.
    y = jnp.dot(h2.astype(cdt), wh_ref[...], preferred_element_type=jnp.float32) + bh
    # per-lane clamp: 2 VPU ops, no select feeding the store.
    out_ref[...] = jnp.minimum(jnp.maximum(y, lo), hi).astype(out_ref.dtype)


def pack_params(params, num_inputs, num_actions, hidden_dim, dtype=jnp.bfloat16):
    """Pad each weight to its own lane-aligned width; build the bias+clamp slab."""
    two_na = 2 * num_actions
    K1 = _round_up(num_inputs, 128)
    H = _round_up(hidden_dim, 128)
    OUT = _round_up(two_na, 128)
    Wb = max(H, OUT)

    w1 = jnp.pad(params["w1"], ((0, K1 - num_inputs), (0, H - hidden_dim)))
    w2 = jnp.pad(params["w2"], ((0, H - hidden_dim), (0, H - hidden_dim)))
    wh = jnp.concatenate([params["wm"], params["ws"]], axis=1)                 # (hd, 2*na)
    wh = jnp.pad(wh, ((0, H - hidden_dim), (0, OUT - two_na)))

    def row(v, width):
        v = v.reshape(1, -1)
        return jnp.pad(v, ((0, 0), (0, width - v.shape[1]))).astype(jnp.float32)

    bh = jnp.concatenate([params["bm"].reshape(1, -1),
                          params["bs"].reshape(1, -1)], axis=1)                # (1, 2*na)
    lane = jnp.arange(Wb)
    is_log_std_lane = lane >= num_actions   # lanes >= 2*na also clamped; they are discarded
    lo = jnp.where(is_log_std_lane, LOG_SIG_MIN, -jnp.inf)[None, :].astype(jnp.float32)
    hi = jnp.where(is_log_std_lane, LOG_SIG_MAX, jnp.inf)[None, :].astype(jnp.float32)

    b_slab = jnp.concatenate(
        [row(params["b1"], Wb), row(params["b2"], Wb), row(bh, Wb),
         lo, hi, jnp.zeros((3, Wb), jnp.float32)], axis=0)                     # (8, Wb) f32

    return {
        "w1": w1.astype(dtype),
        "w2": w2.astype(dtype),
        "wh": wh.astype(dtype),
        "b_slab": b_slab,
        "num_inputs": num_inputs,
        "num_actions": num_actions,
        "in_pad": K1,
        "hidden_pad": H,
        "out_pad": OUT,
    }


def gaussian_policy_forward(state, packed, *, block_b=1024, out_dtype=jnp.float32):
    """GaussianPolicy.forward hot path: returns (mean, log_std)."""
    B, ni = state.shape
    assert ni == packed["num_inputs"]
    na = packed["num_actions"]
    K1, H, OUT = packed["in_pad"], packed["hidden_pad"], packed["out_pad"]
    w1, w2, wh, b_slab = packed["w1"], packed["w2"], packed["wh"], packed["b_slab"]
    cdt = w1.dtype
    itemsize = jnp.dtype(cdt).itemsize
    sub = 16 if itemsize == 2 else 8

    # Balanced batch tiles: at least 2 grid steps when the batch allows (so the
    # "parallel" axis shards across both v7x TensorCores); TB a sublane multiple;
    # worst-case dead padding is one sublane group.
    n_tiles = max(_cdiv(B, block_b), 2 if B >= 2 * sub else 1)
    TB = _round_up(_cdiv(B, n_tiles), sub)
    grid_b = _cdiv(B, TB)
    B_pad = grid_b * TB

    x = state
    if B_pad != B:
        # batch-only pad; the feature dim stays raw (lane-padding happens in-kernel).
        x = jnp.pad(state, ((0, B_pad - B), (0, 0)))

    out_itemsize = jnp.dtype(out_dtype).itemsize
    w_bytes = (K1 * H + H * H + H * OUT) * itemsize + b_slab.size * 4
    flops = 2 * B_pad * (K1 * H + H * H + H * OUT)
    bytes_accessed = B_pad * ni * 4 + w_bytes + B_pad * OUT * out_itemsize

    # VMEM guard for big hidden dims (resident slabs are double-buffered by default);
    # stays untouched for small configs so the common path keeps compiler defaults.
    vmem_need = (2 * w_bytes
                 + 2 * (TB * ni * 4 + TB * OUT * out_itemsize)
                 + TB * K1 * itemsize)
    cp_kwargs = {}
    if vmem_need > (30 << 20):
        cp_kwargs["vmem_limit_bytes"] = int(min(vmem_need + (8 << 20), 128 << 20))

    out = pl.pallas_call(
        functools.partial(_policy_kernel, num_inputs=ni, hidden_pad=H, out_pad=OUT),
        out_shape=jax.ShapeDtypeStruct((B_pad, OUT), out_dtype),
        grid_spec=pltpu.PrefetchScalarGridSpec(
            num_scalar_prefetch=0,
            grid=(grid_b,),
            in_specs=[
                pl.BlockSpec((TB, ni), lambda i: (i, 0)),          # raw state tiles, streamed
                pl.BlockSpec((K1, H), lambda i: (0, 0)),           # resident w1
                pl.BlockSpec((H, H), lambda i: (0, 0)),            # resident w2
                pl.BlockSpec((H, OUT), lambda i: (0, 0)),          # resident fused head [wm|ws]
                pl.BlockSpec((8, b_slab.shape[1]), lambda i: (0, 0)),  # biases + clamp rows
            ],
            out_specs=pl.BlockSpec((TB, OUT), lambda i: (i, 0)),   # lane-dense output slab
            scratch_shapes=[pltpu.VMEM((TB, K1), cdt)],            # in-kernel lane-pad buffer
        ),
        compiler_params=pltpu.CompilerParams(
            dimension_semantics=("parallel",), **cp_kwargs),
        cost_estimate=pl.CostEstimate(
            flops=flops, transcendentals=0, bytes_accessed=bytes_accessed),
    )(x, w1, w2, wh, b_slab)

    mean = out[:B, :na]
    log_std = out[:B, na:2 * na]
    return mean, log_std


# ----------------------- init / reference (PyTorch semantics) -----------------------

def xavier_uniform(key, fan_in, fan_out):
    # matches torch.nn.init.xavier_uniform_(gain=1) for a (fan_out, fan_in)
    # PyTorch weight; stored transposed as (fan_in, fan_out).
    bound = math.sqrt(6.0 / (fan_in + fan_out))
    return jax.random.uniform(key, (fan_in, fan_out), jnp.float32, -bound, bound)


def init_params(key, num_inputs, num_actions, hidden_dim):
    k1, k2, k3, k4 = jax.random.split(key, 4)
    return {
        "w1": xavier_uniform(k1, num_inputs, hidden_dim),
        "b1": jnp.zeros((1, hidden_dim), jnp.float32),
        "w2": xavier_uniform(k2, hidden_dim, hidden_dim),
        "b2": jnp.zeros((1, hidden_dim), jnp.float32),
        "wm": xavier_uniform(k3, hidden_dim, num_actions),
        "bm": jnp.zeros((1, num_actions), jnp.float32),
        "ws": xavier_uniform(k4, hidden_dim, num_actions),
        "bs": jnp.zeros((1, num_actions), jnp.float32),
    }


def reference_forward(state, p):
    h1 = jnp.maximum(state @ p["w1"] + p["b1"], 0.0)
    h2 = jnp.maximum(h1 @ p["w2"] + p["b2"], 0.0)
    mean = h2 @ p["wm"] + p["bm"]
    log_std = jnp.clip(h2 @ p["ws"] + p["bs"], LOG_SIG_MIN, LOG_SIG_MAX)
    return mean, log_std


if __name__ == "__main__":
    # HalfCheetah-like small config: 17-dim observation, 6-dim action.
    batch, num_inputs, num_actions, hidden_dim = 24, 17, 6, 32

    key = jax.random.PRNGKey(0)
    pkey, skey = jax.random.split(key)
    params = init_params(pkey, num_inputs, num_actions, hidden_dim)
    state = jax.random.normal(skey, (batch, num_inputs), jnp.float32)
    ref_mean, ref_log_std = reference_forward(state, params)

    # exact path: f32 matmuls, small block_b to exercise the batch grid / pipeline.
    packed_f32 = pack_params(params, num_inputs, num_actions, hidden_dim, dtype=jnp.float32)
    mean, log_std = gaussian_policy_forward(state, packed_f32, block_b=8)
    jax.block_until_ready((mean, log_std))
    assert mean.shape == (batch, num_actions)
    assert log_std.shape == (batch, num_actions)
    assert jnp.allclose(mean, ref_mean, atol=1e-5, rtol=1e-5)
    assert jnp.allclose(log_std, ref_log_std, atol=1e-5, rtol=1e-5)

    # default production path: bf16 weights on the MXU, f32 accumulate + f32 epilogue.
    packed_bf16 = pack_params(params, num_inputs, num_actions, hidden_dim)   # dtype=bf16
    mean_b, log_std_b = gaussian_policy_forward(state, packed_bf16)
    jax.block_until_ready((mean_b, log_std_b))
    assert jnp.allclose(mean_b, ref_mean, atol=5e-2, rtol=5e-2)
    assert jnp.allclose(log_std_b, ref_log_std, atol=5e-2, rtol=5e-2)

    # TODO(synk): GaussianPolicy.sample() (reparameterized Normal sampling + tanh
    # squashing / log_prob correction) is left to the JAX wrapper level.
    print("KERNEL_OK")
</pallas_src>

<mosaic_0001>
module attributes {stable_mosaic.version = 11 : i64} {
  func.func @_policy_kernel(%arg0: i32, %arg1: memref<8x17xf32, #tpu.memory_space<vmem>>, %arg2: memref<128x128xf32, #tpu.memory_space<vmem>>, %arg3: memref<128x128xf32, #tpu.memory_space<vmem>>, %arg4: memref<128x128xf32, #tpu.memory_space<vmem>>, %arg5: memref<8x128xf32, #tpu.memory_space<vmem>>, %arg6: memref<8x128xf32, #tpu.memory_space<vmem>>, %arg7: memref<8x128xf32, #tpu.memory_space<vmem>>) attributes {dimension_semantics = [#tpu.dimension_semantics<parallel>], iteration_bounds = array<i64: 3>, scalar_prefetch = 0 : i64, scratch_operands = 1 : i64, tpu.core_type = #tpu.core_type<tc>, window_params = [{transform_indices = @transform_0, window_bounds = array<i64: 8, 17>}, {pipeline_mode = #tpu.pipeline_mode<synchronous>, transform_indices = @transform_1, window_bounds = array<i64: 128, 128>}, {pipeline_mode = #tpu.pipeline_mode<synchronous>, transform_indices = @transform_2, window_bounds = array<i64: 128, 128>}, {pipeline_mode = #tpu.pipeline_mode<synchronous>, transform_indices = @transform_3, window_bounds = array<i64: 128, 128>}, {pipeline_mode = #tpu.pipeline_mode<synchronous>, transform_indices = @transform_4, window_bounds = array<i64: 8, 128>}, {transform_indices = @transform_5, window_bounds = array<i64: 8, 128>}]} {
    %cst = arith.constant 0.000000e+00 : f32
    %0 = vector.broadcast %cst : f32 to vector<8x128xf32>
    %c0 = arith.constant 0 : index
    %c0_0 = arith.constant 0 : index
    %1 = vector.load %arg7[%c0, %c0_0] : memref<8x128xf32, #tpu.memory_space<vmem>>, vector<8x128xf32>
    tpu.vector_store %arg7[%c0, %c0_0], %0 {strides = array<i32>} : memref<8x128xf32, #tpu.memory_space<vmem>>, vector<8x128xf32>,
    %c0_1 = arith.constant 0 : index
    %c0_2 = arith.constant 0 : index
    %2 = vector.load %arg1[%c0_1, %c0_2] : memref<8x17xf32, #tpu.memory_space<vmem>>, vector<8x17xf32>
    %c0_3 = arith.constant 0 : index
    %c0_4 = arith.constant 0 : index
    %3 = vector.load %arg7[%c0_3, %c0_4] : memref<8x128xf32, #tpu.memory_space<vmem>>, vector<8x17xf32>
    tpu.vector_store %arg7[%c0_3, %c0_4], %2 {strides = array<i32>} : memref<8x128xf32, #tpu.memory_space<vmem>>, vector<8x17xf32>,
    %c0_5 = arith.constant 0 : index
    %c0_6 = arith.constant 0 : index
    %4 = vector.load %arg7[%c0_5, %c0_6] : memref<8x128xf32, #tpu.memory_space<vmem>>, vector<8x128xf32>
    %c0_7 = arith.constant 0 : index
    %c0_8 = arith.constant 0 : index
    %5 = vector.load %arg5[%c0_7, %c0_8] : memref<8x128xf32, #tpu.memory_space<vmem>>, vector<1x128xf32>
    %c1 = arith.constant 1 : index
    %c0_9 = arith.constant 0 : index
    %6 = vector.load %arg5[%c1, %c0_9] : memref<8x128xf32, #tpu.memory_space<vmem>>, vector<1x128xf32>
    %c2 = arith.constant 2 : index
    %c0_10 = arith.constant 0 : index
    %7 = vector.load %arg5[%c2, %c0_10] : memref<8x128xf32, #tpu.memory_space<vmem>>, vector<1x128xf32>
    %c3 = arith.constant 3 : index
    %c0_11 = arith.constant 0 : index
    %8 = vector.load %arg5[%c3, %c0_11] : memref<8x128xf32, #tpu.memory_space<vmem>>, vector<1x128xf32>
    %c4 = arith.constant 4 : index
    %c0_12 = arith.constant 0 : index
    %9 = vector.load %arg5[%c4, %c0_12] : memref<8x128xf32, #tpu.memory_space<vmem>>, vector<1x128xf32>
    %c0_13 = arith.constant 0 : index
    %c0_14 = arith.constant 0 : index
    %10 = vector.load %arg2[%c0_13, %c0_14] : memref<128x128xf32, #tpu.memory_space<vmem>>, vector<128x128xf32>
    %cst_15 = arith.constant dense<0.000000e+00> : vector<8x128xf32>
    %11 = tpu.matmul %4, %10, %cst_15 {dimension_numbers = #tpu.dot_dimension_numbers<[1], [0], [0], [1], [0, 0, 1, 1], [], []>} : vector<8x128xf32>, vector<128x128xf32>, vector<8x128xf32> -> vector<8x128xf32>
    %12 = vector.broadcast %5 : vector<1x128xf32> to vector<8x128xf32>
    %13 = arith.addf %11, %12 : vector<8x128xf32>
    %cst_16 = arith.constant 0.000000e+00 : f32
    %14 = vector.broadcast %cst_16 : f32 to vector<8x128xf32>
    %15 = arith.maximumf %13, %14 : vector<8x128xf32>
    %c0_17 = arith.constant 0 : index
    %c0_18 = arith.constant 0 : index
    %16 = vector.load %arg3[%c0_17, %c0_18] : memref<128x128xf32, #tpu.memory_space<vmem>>, vector<128x128xf32>
    %cst_19 = arith.constant dense<0.000000e+00> : vector<8x128xf32>
    %17 = tpu.matmul %15, %16, %cst_19 {dimension_numbers = #tpu.dot_dimension_numbers<[1], [0], [0], [1], [0, 0, 1, 1], [], []>} : vector<8x128xf32>, vector<128x128xf32>, vector<8x128xf32> -> vector<8x128xf32>
    %18 = vector.broadcast %6 : vector<1x128xf32> to vector<8x128xf32>
    %19 = arith.addf %17, %18 : vector<8x128xf32>
    %cst_20 = arith.constant 0.000000e+00 : f32
    %20 = vector.broadcast %cst_20 : f32 to vector<8x128xf32>
    %21 = arith.maximumf %19, %20 : vector<8x128xf32>
    %c0_21 = arith.constant 0 : index
    %c0_22 = arith.constant 0 : index
    %22 = vector.load %arg4[%c0_21, %c0_22] : memref<128x128xf32, #tpu.memory_space<vmem>>, vector<128x128xf32>
    %cst_23 = arith.constant dense<0.000000e+00> : vector<8x128xf32>
    %23 = tpu.matmul %21, %22, %cst_23 {dimension_numbers = #tpu.dot_dimension_numbers<[1], [0], [0], [1], [0, 0, 1, 1], [], []>} : vector<8x128xf32>, vector<128x128xf32>, vector<8x128xf32> -> vector<8x128xf32>
    %24 = vector.broadcast %7 : vector<1x128xf32> to vector<8x128xf32>
    %25 = arith.addf %23, %24 : vector<8x128xf32>
    %26 = vector.broadcast %8 : vector<1x128xf32> to vector<8x128xf32>
    %27 = arith.maximumf %25, %26 : vector<8x128xf32>
    %28 = vector.broadcast %9 : vector<1x128xf32> to vector<8x128xf32>
    %29 = arith.minimumf %27, %28 : vector<8x128xf32>
    %c0_24 = arith.constant 0 : index
    %c0_25 = arith.constant 0 : index
    %30 = vector.load %arg6[%c0_24, %c0_25] : memref<8x128xf32, #tpu.memory_space<vmem>>, vector<8x128xf32>
    tpu.vector_store %arg6[%c0_24, %c0_25], %29 {strides = array<i32>} : memref<8x128xf32, #tpu.memory_space<vmem>>, vector<8x128xf32>,
    return
  }
  func.func @transform_0(%arg0: i32) -> (i32, i32) {
    %c0_i32 = arith.constant 0 : i32
    %c0_i32_0 = arith.constant 0 : i32
    return %arg0, %c0_i32 : i32, i32
  }
  func.func @transform_1(%arg0: i32) -> (i32, i32) {
    %c0_i32 = arith.constant 0 : i32
    %c0_i32_0 = arith.constant 0 : i32
    %c0_i32_1 = arith.constant 0 : i32
    return %c0_i32, %c0_i32_0 : i32, i32
  }
  func.func @transform_2(%arg0: i32) -> (i32, i32) {
    %c0_i32 = arith.constant 0 : i32
    %c0_i32_0 = arith.constant 0 : i32
    %c0_i32_1 = arith.constant 0 : i32
    return %c0_i32, %c0_i32_0 : i32, i32
  }
  func.func @transform_3(%arg0: i32) -> (i32, i32) {
    %c0_i32 = arith.constant 0 : i32
    %c0_i32_0 = arith.constant 0 : i32
    %c0_i32_1 = arith.constant 0 : i32
    return %c0_i32, %c0_i32_0 : i32, i32
  }
  func.func @transform_4(%arg0: i32) -> (i32, i32) {
    %c0_i32 = arith.constant 0 : i32
    %c0_i32_0 = arith.constant 0 : i32
    %c0_i32_1 = arith.constant 0 : i32
    return %c0_i32, %c0_i32_0 : i32, i32
  }
  func.func @transform_5(%arg0: i32) -> (i32, i32) {
    %c0_i32 = arith.constant 0 : i32
    %c0_i32_0 = arith.constant 0 : i32
    return %arg0, %c0_i32 : i32, i32
  }
}

</mosaic_0001>

<llo_original>
// kernel: tpu_custom_call.1
$region0: #{tpu_custom_call.1}
  #allocation0 [shape = 'u32[]', space=smem, size = 0x4, offset = 0x4, fixed_abs, tag = 'smem constant byte address 0x4 - core index']
  #allocation1 [shape = 'u32[72,128]{1,0:T(1,128)}', space=vmem, size = 0x9000, scoped, tag = 'internal scratch']
  #allocation2 [shape = 'f32[8,128]{1,0:T(8,128)}', space=vmem, size = 0x1000, scoped, tag = 'scratch operand']
  %s0 = inlined_call_operand.hbm [shape: f32[24,17], index: 0, kind: input, shape index: {}]
  %s1 = inlined_call_operand.hbm [shape: f32[128,128], index: 1, kind: input, shape index: {}]
  %s2 = inlined_call_operand.hbm [shape: f32[128,128], index: 2, kind: input, shape index: {}]
  %s3 = inlined_call_operand.hbm [shape: f32[128,128], index: 3, kind: input, shape index: {}]
  %s4 = inlined_call_operand.hbm [shape: f32[8,128], index: 4, kind: input, shape index: {}]
  %s5 = inlined_call_operand.hbm [shape: f32[24,128], index: 5, kind: output, shape index: {}]
  %s6 = sld [smem:[#allocation0]]
  $region73: #{tpu_custom_call.1} parent=0
    _
  %s8 = ssub.s32 1, %s6
  %s9 = scalar_select 0, %s8, %s6
  $region1: #{tpu_custom_call.1} parent=0
    #allocation3 [shape = 'u8[8192]{0}', space=vmem, size = 0x2000, scoped, tag = 'input window, operand 0']
    #allocation4 [shape = 's32[2]{0}', space=sflag, size = 0x8, scoped, tag = 'scoped memory for tpu_custom_call.1']
    #allocation5 [shape = 's32[2]{0}', space=sflag, size = 0x8, scoped, tag = 'scoped memory for tpu_custom_call.1']
    #allocation6 [shape = 'u8[65536]{0}', space=vmem, size = 0x10000, scoped, tag = 'input window, operand 1, single buffered']
    #allocation7 [shape = 's32[1]{0}', space=sflag, size = 0x4, scoped, tag = 'scoped memory for tpu_custom_call.1']
    #allocation8 [shape = 'u8[65536]{0}', space=vmem, size = 0x10000, scoped, tag = 'input window, operand 2, single buffered']
    #allocation9 [shape = 'u8[65536]{0}', space=vmem, size = 0x10000, scoped, tag = 'input window, operand 3, single buffered']
    #allocation10 [shape = 's32[1]{0}', space=sflag, size = 0x4, scoped, tag = 'scoped memory for tpu_custom_call.1']
    #allocation11 [shape = 'u8[4096]{0}', space=vmem, size = 0x1000, scoped, tag = 'input window, operand 4, single buffered']
    #allocation12 [shape = 'u8[8192]{0}', space=vmem, size = 0x2000, scoped, tag = 'output window, operand 0']
    %10 = vsyncpa [#allocation4], 0
    %s11 = scalar_lea.sflag [#allocation4], 1
    %12 = vsyncpa %s11, 0
    %13 = vsyncpa [#allocation7], 0
    %14 = vsyncpa [#allocation10], 0
    %15 = vsyncpa [#allocation5], 0
    %s16 = scalar_lea.sflag [#allocation5], 1
    %17 = vsyncpa %s16, 0
    loop: start=0, step=1, limit=5
    $region2: #{tpu_custom_call.1} parent=1 // loop_pre_header
      _
    $region3: #{tpu_custom_call.1} parent=1 // loop_header
      %s19 = sphi 0, %s23
      %p20 = scmp.ge.s32.totalorder %s19, 5
      %s29 = sphi 0, %s31
      %s32 = sphi 0, %s29
      %s33 = sphi 0, %s32
      %s49 = sphi 0, %s33
      %s53 = sphi 0, %s53
      %s55 = sphi 0, %s53
      %s56 = sphi 0, %s55
      %s70 = sphi 0, %s56
      %s74 = sphi 0, %s74
      %s76 = sphi 0, %s74
      %s77 = sphi 0, %s76
      %s91 = sphi 0, %s77
      %s95 = sphi 0, %s95
      %s97 = sphi 0, %s95
      %s98 = sphi 0, %s97
      %s112 = sphi 0, %s98
      %s116 = sphi 0, %s116
      %s118 = sphi 0, %s116
      %s119 = sphi 0, %s118
      %s133 = sphi 0, %s119
      %s139 = sphi 0, %s141
      %s142 = sphi 0, %s139
      %s143 = sphi 0, %s142
      %s159 = sphi 0, %s143
    $region4: #{tpu_custom_call.1} parent=1 // loop_header_branch
      %22 = sbr.rel (%p20) target = $region8
    $region5: #{tpu_custom_call.1} parent=1 // loop_body
      %s24 = ssub.s32 %s19, 1
      %s25 = ssub.s32 %s19, 2
      %s26 = sadd.s32 %s19, 1
      %s27 = ssub.s32 %s19, %s26
      %p28 = scmp.eq.s32.totalorder %s27, 0
      %s30 = sadd.s32 %s29, 1
      %s31 = scalar_select %p28, %s29, %s30
      %p34 = pneg %p28
      %p35 = scmp.eq.s32.totalorder %s19, 2
      %p36 = por %p34, %p35
      %p37 = scmp.ne.s32.totalorder %s29, %s32
      %p38 = scmp.eq.s32.totalorder %s19, 0
      %p39 = por %p37, %p38
      %p40 = scmp.ne.s32.totalorder %s29, %s32
      %p41 = scmp.eq.s32.totalorder %s24, 2
      %p42 = por %p40, %p41
      %p43 = scmp.ne.s32.totalorder %s32, %s33
      %p44 = scmp.eq.s32.totalorder %s24, 0
      %p45 = por %p43, %p44
      %p46 = scmp.ne.s32.totalorder %s32, %s33
      %p47 = scmp.eq.s32.totalorder %s25, 2
      %p48 = por %p46, %p47
      %p50 = scmp.ne.s32.totalorder %s33, %s49
      %p51 = scmp.eq.s32.totalorder %s25, 0
      %p52 = por %p50, %p51
      %s54 = sadd.s32 %s53, 1
      %p57 = scmp.eq.s32.totalorder %s19, 2
      %p58 = scmp.ne.s32.totalorder %s53, %s55
      %p59 = scmp.eq.s32.totalorder %s19, 0
      %p60 = por %p58, %p59
      %p61 = scmp.ne.s32.totalorder %s53, %s55
      %p62 = scmp.eq.s32.totalorder %s24, 2
      %p63 = por %p61, %p62
      %p64 = scmp.ne.s32.totalorder %s55, %s56
      %p65 = scmp.eq.s32.totalorder %s24, 0
      %p66 = por %p64, %p65
      %p67 = scmp.ne.s32.totalorder %s55, %s56
      %p68 = scmp.eq.s32.totalorder %s25, 2
      %p69 = por %p67, %p68
      %p71 = scmp.ne.s32.totalorder %s56, %s70
      %p72 = scmp.eq.s32.totalorder %s25, 0
      %p73 = por %p71, %p72
      %s75 = sadd.s32 %s74, 1
      %p78 = scmp.eq.s32.totalorder %s19, 2
      %p79 = scmp.ne.s32.totalorder %s74, %s76
      %p80 = scmp.eq.s32.totalorder %s19, 0
      %p81 = por %p79, %p80
      %p82 = scmp.ne.s32.totalorder %s74, %s76
      %p83 = scmp.eq.s32.totalorder %s24, 2
      %p84 = por %p82, %p83
      %p85 = scmp.ne.s32.totalorder %s76, %s77
      %p86 = scmp.eq.s32.totalorder %s24, 0
      %p87 = por %p85, %p86
      %p88 = scmp.ne.s32.totalorder %s76, %s77
      %p89 = scmp.eq.s32.totalorder %s25, 2
      %p90 = por %p88, %p89
      %p92 = scmp.ne.s32.totalorder %s77, %s91
      %p93 = scmp.eq.s32.totalorder %s25, 0
      %p94 = por %p92, %p93
      %s96 = sadd.s32 %s95, 1
      %p99 = scmp.eq.s32.totalorder %s19, 2
      %p100 = scmp.ne.s32.totalorder %s95, %s97
      %p101 = scmp.eq.s32.totalorder %s19, 0
      %p102 = por %p100, %p101
      %p103 = scmp.ne.s32.totalorder %s95, %s97
      %p104 = scmp.eq.s32.totalorder %s24, 2
      %p105 = por %p103, %p104
      %p106 = scmp.ne.s32.totalorder %s97, %s98
      %p107 = scmp.eq.s32.totalorder %s24, 0
      %p108 = por %p106, %p107
      %p109 = scmp.ne.s32.totalorder %s97, %s98
      %p110 = scmp.eq.s32.totalorder %s25, 2
      %p111 = por %p109, %p110
      %p113 = scmp.ne.s32.totalorder %s98, %s112
      %p114 = scmp.eq.s32.totalorder %s25, 0
      %p115 = por %p113, %p114
      %s117 = sadd.s32 %s116, 1
      %p120 = scmp.eq.s32.totalorder %s19, 2
      %p121 = scmp.ne.s32.totalorder %s116, %s118
      %p122 = scmp.eq.s32.totalorder %s19, 0
      %p123 = por %p121, %p122
      %p124 = scmp.ne.s32.totalorder %s116, %s118
      %p125 = scmp.eq.s32.totalorder %s24, 2
      %p126 = por %p124, %p125
      %p127 = scmp.ne.s32.totalorder %s118, %s119
      %p128 = scmp.eq.s32.totalorder %s24, 0
      %p129 = por %p127, %p128
      %p130 = scmp.ne.s32.totalorder %s118, %s119
      %p131 = scmp.eq.s32.totalorder %s25, 2
      %p132 = por %p130, %p131
      %p134 = scmp.ne.s32.totalorder %s119, %s133
      %p135 = scmp.eq.s32.totalorder %s25, 0
      %p136 = por %p134, %p135
      %s137 = ssub.s32 %s19, %s26
      %p138 = scmp.eq.s32.totalorder %s137, 0
      %s140 = sadd.s32 %s139, 1
      %s141 = scalar_select %p138, %s139, %s140
      %p144 = pneg %p138
      %p145 = scmp.eq.s32.totalorder %s19, 2
      %p146 = por %p144, %p145
      %p147 = scmp.ne.s32.totalorder %s139, %s142
      %p148 = scmp.eq.s32.totalorder %s19, 0
      %p149 = por %p147, %p148
      %p150 = scmp.ne.s32.totalorder %s139, %s142
      %p151 = scmp.eq.s32.totalorder %s24, 2
      %p152 = por %p150, %p151
      %p153 = scmp.ne.s32.totalorder %s142, %s143
      %p154 = scmp.eq.s32.totalorder %s24, 0
      %p155 = por %p153, %p154
      %p156 = scmp.ne.s32.totalorder %s142, %s143
      %p157 = scmp.eq.s32.totalorder %s25, 2
      %p158 = por %p156, %p157
      %p160 = scmp.ne.s32.totalorder %s143, %s159
      %p161 = scmp.eq.s32.totalorder %s25, 0
      %p162 = por %p160, %p161
      %p163 = scmp.le.s32.totalorder 1, %s19
      %p164 = scmp.lt.s32.totalorder %s19, 4
      %p165 = pnand %p163, %p164
      %p166 = pneg %p165
      // Predicated region
      $region9: #{tpu_custom_call.1} parent=5 // pred_check
        _
      $region10: #{tpu_custom_call.1} parent=5 // pred_check_branch
        %168 = sbr.rel (%p165) target = $region12
      $region11: #{tpu_custom_call.1} parent=5 // pred_region
        %s169 = ssub.s32 %s19, 1
        // Predicated region
        $region13: #{tpu_custom_call.1} parent=11 // pred_check
          %p170 = pneg %p66
        $region14: #{tpu_custom_call.1} parent=11 // pred_check_branch
          %172 = sbr.rel (%p170) target = $region16
        $region15: #{tpu_custom_call.1} parent=11 // pred_region
          %174 = vsyncadd [#allocation7], 0
          %s175 = sshll.u32 %s1, 4
          %s176 = int_to_ptr.hbm [resolvable:$true] %s175
          %s177 = sshll.u32 [#allocation6], 4
          %s178 = int_to_ptr.vmem [resolvable:$true] %s177
          %183 = dma.hbm_to_vmem [thread:$0]  %s176, 2048, %s178, [#allocation7], 128, 128, 8
        $region16: #{tpu_custom_call.1} parent=11 // pred_fallthru
          _
        // Predicated region
        $region17: #{tpu_custom_call.1} parent=11 // pred_check
          %p184 = pneg %p87
        $region18: #{tpu_custom_call.1} parent=11 // pred_check_branch
          %186 = sbr.rel (%p184) target = $region20
        $region19: #{tpu_custom_call.1} parent=11 // pred_region
          %188 = vsyncadd [#allocation7], 0
          %s189 = sshll.u32 %s2, 4
          %s190 = int_to_ptr.hbm [resolvable:$true] %s189
          %s191 = sshll.u32 [#allocation8], 4
          %s192 = int_to_ptr.vmem [resolvable:$true] %s191
          %197 = dma.hbm_to_vmem [thread:$0]  %s190, 2048, %s192, [#allocation7], 128, 128, 8
        $region20: #{tpu_custom_call.1} parent=11 // pred_fallthru
          _
        // Predicated region
        $region21: #{tpu_custom_call.1} parent=11 // pred_check
          %p198 = pneg %p108
        $region22: #{tpu_custom_call.1} parent=11 // pred_check_branch
          %200 = sbr.rel (%p198) target = $region24
        $region23: #{tpu_custom_call.1} parent=11 // pred_region
          %202 = vsyncadd [#allocation10], 0
          %s203 = sshll.u32 %s3, 4
          %s204 = int_to_ptr.hbm [resolvable:$true] %s203
          %s205 = sshll.u32 [#allocation9], 4
          %s206 = int_to_ptr.vmem [resolvable:$true] %s205
          %211 = dma.hbm_to_vmem [thread:$0]  %s204, 2048, %s206, [#allocation10], 128, 128, 8
        $region24: #{tpu_custom_call.1} parent=11 // pred_fallthru
          _
        // Predicated region
        $region25: #{tpu_custom_call.1} parent=11 // pred_check
          %p212 = pneg %p129
        $region26: #{tpu_custom_call.1} parent=11 // pred_check_branch
          %214 = sbr.rel (%p212) target = $region28
        $region27: #{tpu_custom_call.1} parent=11 // pred_region
          %216 = vsyncadd [#allocation10], 0
          %s218 = sshll.u32 %s4, 4
          %s219 = int_to_ptr.hbm [resolvable:$true] %s218
          %s220 = sshll.u32 [#allocation11], 4
          %s221 = int_to_ptr.vmem [resolvable:$true] %s220
          %223 = dma.hbm_to_vmem [thread:$0]  %s219, 128, %s221, [#allocation10]
        $region28: #{tpu_custom_call.1} parent=11 // pred_fallthru
          _
      $region12: #{tpu_custom_call.1} parent=5 // pred_fallthru
        _
      %p224 = scmp.lt.s32.totalorder %s19, 3
      // Predicated region
      $region29: #{tpu_custom_call.1} parent=5 // pred_check
        %p225 = pneg %p224
      $region30: #{tpu_custom_call.1} parent=5 // pred_check_branch
        %227 = sbr.rel (%p225) target = $region32
      $region31: #{tpu_custom_call.1} parent=5 // pred_region
        // Predicated region
        $region33: #{tpu_custom_call.1} parent=31 // pred_check
          %p228 = pneg %p39
        $region34: #{tpu_custom_call.1} parent=31 // pred_check_branch
          %230 = sbr.rel (%p228) target = $region36
        $region35: #{tpu_custom_call.1} parent=31 // pred_region
          %s231 = sand.u32 %s29, 1
          %s232 = scalar_lea.sflag [#allocation4], %s231
          %s233 = sand.u32 %s29, 1
          %s234 = smul.addr %s233, 8
          %s235 = scalar_lea.vmem [#allocation3], %s234
          %237 = vsyncadd %s232, 0
          %s238 = smul.addr %s19, 8
          %s239 = scalar_lea.hbm %s0, %s238
          %s241 = sshll.u32 %s239, 4
          %s242 = int_to_ptr.hbm [resolvable:$true] %s241
          %s243 = sshll.u32 %s235, 4
          %s244 = int_to_ptr.vmem [resolvable:$true] %s243
          %246 = dma.hbm_to_vmem [thread:$0]  %s242, 128, %s244, %s232
        $region36: #{tpu_custom_call.1} parent=31 // pred_fallthru
          _
      $region32: #{tpu_custom_call.1} parent=5 // pred_fallthru
        _
      %p247 = scmp.le.s32.totalorder 1, %s19
      %p248 = scmp.lt.s32.totalorder %s19, 4
      %p249 = pnand %p247, %p248
      %p250 = pneg %p249
      // Predicated region
      $region37: #{tpu_custom_call.1} parent=5 // pred_check
        _
      $region38: #{tpu_custom_call.1} parent=5 // pred_check_branch
        %252 = sbr.rel (%p249) target = $region40
      $region39: #{tpu_custom_call.1} parent=5 // pred_region
        %s253 = ssub.s32 %s19, 1
        %s254 = sand.u32 %s32, 1
        %s255 = scalar_lea.sflag [#allocation4], %s254
        %s256 = sand.u32 %s32, 1
        %s257 = smul.addr %s256, 8
        %s258 = scalar_lea.vmem [#allocation3], %s257
        // Predicated region
        $region41: #{tpu_custom_call.1} parent=39 // pred_check
          %p259 = pneg %p45
        $region42: #{tpu_custom_call.1} parent=39 // pred_check_branch
          %261 = sbr.rel (%p259) target = $region44
        $region43: #{tpu_custom_call.1} parent=39 // pred_region
          %263 = dma.done %s255, 128
        $region44: #{tpu_custom_call.1} parent=39 // pred_fallthru
          _
        // Predicated region
        $region45: #{tpu_custom_call.1} parent=39 // pred_check
          %p264 = pneg %p66
        $region46: #{tpu_custom_call.1} parent=39 // pred_check_branch
          %266 = sbr.rel (%p264) target = $region48
        $region47: #{tpu_custom_call.1} parent=39 // pred_region
          %268 = dma.done [#allocation7], 2048
        $region48: #{tpu_custom_call.1} parent=39 // pred_fallthru
          _
        // Predicated region
        $region49: #{tpu_custom_call.1} parent=39 // pred_check
          %p269 = pneg %p87
        $region50: #{tpu_custom_call.1} parent=39 // pred_check_branch
          %271 = sbr.rel (%p269) target = $region52
        $region51: #{tpu_custom_call.1} parent=39 // pred_region
          %273 = dma.done [#allocation7], 2048
        $region52: #{tpu_custom_call.1} parent=39 // pred_fallthru
          _
        // Predicated region
        $region53: #{tpu_custom_call.1} parent=39 // pred_check
          %p274 = pneg %p108
        $region54: #{tpu_custom_call.1} parent=39 // pred_check_branch
          %276 = sbr.rel (%p274) target = $region56
        $region55: #{tpu_custom_call.1} parent=39 // pred_region
          %278 = dma.done [#allocation10], 2048
        $region56: #{tpu_custom_call.1} parent=39 // pred_fallthru
          _
        // Predicated region
        $region57: #{tpu_custom_call.1} parent=39 // pred_check
          %p279 = pneg %p129
        $region58: #{tpu_custom_call.1} parent=39 // pred_check_branch
          %281 = sbr.rel (%p279) target = $region60
        $region59: #{tpu_custom_call.1} parent=39 // pred_region
          %283 = dma.done [#allocation10], 128
        $region60: #{tpu_custom_call.1} parent=39 // pred_fallthru
          _
        %s284 = sand.u32 %s32, 1
        %s285 = scalar_lea.sflag [#allocation4], %s284
        %s286 = sand.u32 %s32, 1
        %s287 = smul.addr %s286, 8
        %s288 = scalar_lea.vmem [#allocation3], %s287
        %p289 = pneg %p45
        %p290 = pneg %p42
        %p291 = pneg %p66
        %p292 = pneg %p63
        %p293 = pneg %p87
        %p294 = pneg %p84
        %p295 = pneg %p108
        %p296 = pneg %p105
        %p297 = pneg %p129
        %p298 = pneg %p126
        %p299 = pneg %p155
        %p300 = pneg %p152
        %s301 = sand.u32 %s142, 1
        %s302 = scalar_lea.sflag [#allocation5], %s301
        %s303 = sand.u32 %s142, 1
        %s304 = smul.addr %s303, 8
        %s305 = scalar_lea.vmem [#allocation12], %s304
        %306 = vst [vmem:[#allocation2] sm:$0xff] 0.0
        %v307 = vld [vmem:[%s258] sm:$0xff]
        %vm308 = vcmask 138240
        %309 = vst.msk [vmem:[#allocation2] sm:$0xff] %vm308, %v307
        %v310 = vld [vmem:[#allocation2] sm:$0xff]
        %v311 = vld [vmem:[#allocation11] sm:$0x1]
        %v312 = vld [vmem:[#allocation11 + $0x1] sm:$0x1]
        %v313 = vld [vmem:[#allocation11 + $0x2] sm:$0x1]
        %v314 = vld [vmem:[#allocation11 + $0x3] sm:$0x1]
        %v315 = vld [vmem:[#allocation11 + $0x4] sm:$0x1]
        %v316 = vld [vmem:[#allocation6] sm:$0xff]
        %v317 = vld [vmem:[#allocation6 + $0x8] sm:$0xff]
        %v318 = vld [vmem:[#allocation6 + $0x10] sm:$0xff]
        %v319 = vld [vmem:[#allocation6 + $0x18] sm:$0xff]
        %v320 = vld [vmem:[#allocation6 + $0x20] sm:$0xff]
        %v321 = vld [vmem:[#allocation6 + $0x28] sm:$0xff]
        %v322 = vld [vmem:[#allocation6 + $0x30] sm:$0xff]
        %v323 = vld [vmem:[#allocation6 + $0x38] sm:$0xff]
        %v324 = vld [vmem:[#allocation6 + $0x40] sm:$0xff]
        %v325 = vld [vmem:[#allocation6 + $0x48] sm:$0xff]
        %v326 = vld [vmem:[#allocation6 + $0x50] sm:$0xff]
        %v327 = vld [vmem:[#allocation6 + $0x58] sm:$0xff]
        %v328 = vld [vmem:[#allocation6 + $0x60] sm:$0xff]
        %v329 = vld [vmem:[#allocation6 + $0x68] sm:$0xff]
        %v330 = vld [vmem:[#allocation6 + $0x70] sm:$0xff]
        %v331 = vld [vmem:[#allocation6 + $0x78] sm:$0xff]
        %v332 = vperm.slane %v311, 0
        %333 = vmatpush.msra.mxu0 %v331
        %334 = vmatpush.msra.mxu0 %v330
        %335 = vmatpush.msra.mxu0 %v329
        %336 = vmatpush.msra.mxu0 %v328
        %337 = vmatpush.msra.mxu0 %v327
        %338 = vmatpush.msra.mxu0 %v326
        %339 = vmatpush.msra.mxu0 %v325
        %340 = vmatpush.msra.mxu0 %v324
        %341 = vmatpush.msra.mxu0 %v323
        %342 = vmatpush.msra.mxu0 %v322
        %343 = vmatpush.msra.mxu0 %v321
        %344 = vmatpush.msra.mxu0 %v320
        %345 = vmatpush.msra.mxu0 %v319
        %346 = vmatpush.msra.mxu0 %v318
        %347 = vmatpush.msra.mxu0 %v317
        %348 = vmatpush.msra.mxu0 %v316
        %349 = vmatmul.f32.gmra.mxu0 %v310
        %v350 = vpop.f32.mrf.mxu0
        %v351 = vadd.f32 %v332, %v350
        %352 = vdwg.mxu0
        %v353 = vmax.f32 %v351, 0.0
        %v354 = vld [vmem:[#allocation8] sm:$0xff]
        %v355 = vld [vmem:[#allocation8 + $0x8] sm:$0xff]
        %v356 = vld [vmem:[#allocation8 + $0x10] sm:$0xff]
        %v357 = vld [vmem:[#allocation8 + $0x18] sm:$0xff]
        %v358 = vld [vmem:[#allocation8 + $0x20] sm:$0xff]
        %v359 = vld [vmem:[#allocation8 + $0x28] sm:$0xff]
        %v360 = vld [vmem:[#allocation8 + $0x30] sm:$0xff]
        %v361 = vld [vmem:[#allocation8 + $0x38] sm:$0xff]
        %v362 = vld [vmem:[#allocation8 + $0x40] sm:$0xff]
        %v363 = vld [vmem:[#allocation8 + $0x48] sm:$0xff]
        %v364 = vld [vmem:[#allocation8 + $0x50] sm:$0xff]
        %v365 = vld [vmem:[#allocation8 + $0x58] sm:$0xff]
        %v366 = vld [vmem:[#allocation8 + $0x60] sm:$0xff]
        %v367 = vld [vmem:[#allocation8 + $0x68] sm:$0xff]
        %v368 = vld [vmem:[#allocation8 + $0x70] sm:$0xff]
        %v369 = vld [vmem:[#allocation8 + $0x78] sm:$0xff]
        %v370 = vperm.slane %v312, 0
        %371 = vmatpush.msra.mxu0 %v369
        %372 = vmatpush.msra.mxu0 %v368
        %373 = vmatpush.msra.mxu0 %v367
        %374 = vmatpush.msra.mxu0 %v366
        %375 = vmatpush.msra.mxu0 %v365
        %376 = vmatpush.msra.mxu0 %v364
        %377 = vmatpush.msra.mxu0 %v363
        %378 = vmatpush.msra.mxu0 %v362
        %379 = vmatpush.msra.mxu0 %v361
        %380 = vmatpush.msra.mxu0 %v360
        %381 = vmatpush.msra.mxu0 %v359
        %382 = vmatpush.msra.mxu0 %v358
        %383 = vmatpush.msra.mxu0 %v357
        %384 = vmatpush.msra.mxu0 %v356
        %385 = vmatpush.msra.mxu0 %v355
        %386 = vmatpush.msra.mxu0 %v354
        %387 = vmatmul.f32.gmra.mxu0 %v353
        %v388 = vpop.f32.mrf.mxu0
        %v389 = vadd.f32 %v370, %v388
        %390 = vdwg.mxu0
        %v391 = vmax.f32 %v389, 0.0
        %v392 = vld [vmem:[#allocation9] sm:$0xff]
        %v393 = vld [vmem:[#allocation9 + $0x8] sm:$0xff]
        %v394 = vld [vmem:[#allocation9 + $0x10] sm:$0xff]
        %v395 = vld [vmem:[#allocation9 + $0x18] sm:$0xff]
        %v396 = vld [vmem:[#allocation9 + $0x20] sm:$0xff]
        %v397 = vld [vmem:[#allocation9 + $0x28] sm:$0xff]
        %v398 = vld [vmem:[#allocation9 + $0x30] sm:$0xff]
        %v399 = vld [vmem:[#allocation9 + $0x38] sm:$0xff]
        %v400 = vld [vmem:[#allocation9 + $0x40] sm:$0xff]
        %v401 = vld [vmem:[#allocation9 + $0x48] sm:$0xff]
        %v402 = vld [vmem:[#allocation9 + $0x50] sm:$0xff]
        %v403 = vld [vmem:[#allocation9 + $0x58] sm:$0xff]
        %v404 = vld [vmem:[#allocation9 + $0x60] sm:$0xff]
        %v405 = vld [vmem:[#allocation9 + $0x68] sm:$0xff]
        %v406 = vld [vmem:[#allocation9 + $0x70] sm:$0xff]
        %v407 = vld [vmem:[#allocation9 + $0x78] sm:$0xff]
        %v408 = vperm.slane %v313, 0
        %409 = vmatpush.msra.mxu0 %v407
        %410 = vmatpush.msra.mxu0 %v406
        %411 = vmatpush.msra.mxu0 %v405
        %412 = vmatpush.msra.mxu0 %v404
        %413 = vmatpush.msra.mxu0 %v403
        %414 = vmatpush.msra.mxu0 %v402
        %415 = vmatpush.msra.mxu0 %v401
        %416 = vmatpush.msra.mxu0 %v400
        %417 = vmatpush.msra.mxu0 %v399
        %418 = vmatpush.msra.mxu0 %v398
        %419 = vmatpush.msra.mxu0 %v397
        %420 = vmatpush.msra.mxu0 %v396
        %421 = vmatpush.msra.mxu0 %v395
        %422 = vmatpush.msra.mxu0 %v394
        %423 = vmatpush.msra.mxu0 %v393
        %424 = vmatpush.msra.mxu0 %v392
        %425 = vmatmul.f32.gmra.mxu0 %v391
        %v426 = vpop.f32.mrf.mxu0
        %v427 = vadd.f32 %v408, %v426
        %428 = vdwg.mxu0
        %v429 = vperm.slane %v314, 0
        %v430 = vmax.f32 %v427, %v429
        %v431 = vperm.slane %v315, 0
        %v432 = vmin.f32 %v430, %v431
        %433 = vst [vmem:[%s305] sm:$0xff] %v432
        %s434 = sand.u32 %s142, 1
        %s435 = scalar_lea.sflag [#allocation5], %s434
        %s436 = sand.u32 %s142, 1
        %s437 = smul.addr %s436, 8
        %s438 = scalar_lea.vmem [#allocation12], %s437
        // Predicated region
        $region61: #{tpu_custom_call.1} parent=39 // pred_check
          %p439 = pneg %p152
        $region62: #{tpu_custom_call.1} parent=39 // pred_check_branch
          %441 = sbr.rel (%p439) target = $region64
        $region63: #{tpu_custom_call.1} parent=39 // pred_region
          %443 = vsyncadd %s435, 0
          %s444 = smul.addr %s24, 8
          %s445 = scalar_lea.hbm %s5, %s444
          %s447 = sshll.u32 %s438, 4
          %s448 = int_to_ptr.vmem [resolvable:$true] %s447
          %s449 = sshll.u32 %s445, 4
          %s450 = int_to_ptr.hbm [resolvable:$true] %s449
          %452 = dma.vmem_to_hbm [thread:$0]  %s448, 128, %s450, %s435
        $region64: #{tpu_custom_call.1} parent=39 // pred_fallthru
          _
      $region40: #{tpu_custom_call.1} parent=5 // pred_fallthru
        _
      %p453 = scmp.le.s32.totalorder 2, %s19
      // Predicated region
      $region65: #{tpu_custom_call.1} parent=5 // pred_check
        %p454 = pneg %p453
      $region66: #{tpu_custom_call.1} parent=5 // pred_check_branch
        %456 = sbr.rel (%p454) target = $region68
      $region67: #{tpu_custom_call.1} parent=5 // pred_region
        %s457 = ssub.s32 %s19, 2
        // Predicated region
        $region69: #{tpu_custom_call.1} parent=67 // pred_check
          %p458 = pneg %p158
        $region70: #{tpu_custom_call.1} parent=67 // pred_check_branch
          %460 = sbr.rel (%p458) target = $region72
        $region71: #{tpu_custom_call.1} parent=67 // pred_region
          %s461 = sand.u32 %s143, 1
          %s462 = scalar_lea.sflag [#allocation5], %s461
          %s463 = sand.u32 %s143, 1
          %s464 = smul.addr %s463, 8
          %s465 = scalar_lea.vmem [#allocation12], %s464
          %467 = dma.done %s462, 128
        $region72: #{tpu_custom_call.1} parent=67 // pred_fallthru
          _
      $region68: #{tpu_custom_call.1} parent=5 // pred_fallthru
        _
    $region6: #{tpu_custom_call.1} parent=1 // loop_footer
      %s23 = sadd.s32 1, %s19
    $region7: #{tpu_custom_call.1} parent=1 // loop_footer_branch
      %18 = sbr.rel target = $region3
    $region8: #{tpu_custom_call.1} parent=1 // loop_exit
      _
    %468 = vsyncpa [#allocation4], 1
    %s469 = scalar_lea.sflag [#allocation4], 1
    %470 = vsyncpa %s469, 1
    %471 = vsyncpa [#allocation7], 1
    %472 = vsyncpa [#allocation10], 1
    %473 = vsyncpa [#allocation5], 1
    %s474 = scalar_lea.sflag [#allocation5], 1
    %475 = vsyncpa %s474, 1

</llo_original>
